<compile_context>
chip_gen: v7x
topology: tpu7x:2x2x1
jax: 0.10.0
libtpu: 0.0.40
codegen_flags: <defaults>
</compile_context>

<pallas_src>
import jax
import jax.numpy as jnp
from jax.experimental import pallas as pl
from jax.experimental.pallas import tpu as pltpu

NUM_OUTPUTS = 4
FEAT = 15            # 3 (card) + 8 (action history) + 4 (action mask)
K_PAD = 16           # FEAT + 1 constant "ones" column (bias fold for layer 1)
H1 = 256
H2 = 32
OUT_W = 8            # packed output: policy cols 0:4, value col 4, cols 5:7 zero
TB_MAX = 2048        # batch tile: working set (incl. (TB,512) f32 act) << 32 MiB
NEG_BIG = 1.0e10


# ----------------------------------------------------------------------------
# Kernel
# ----------------------------------------------------------------------------
def _kuhn_kernel(
    x_ref,       # (TB, K_PAD)     features; col 15 == 1.0 (bias column)
    w1_ref,      # (K_PAD, 2*H1)   [pw1 | vw1], row 15 = [pb1 | vb1]
    w2_ref,      # (2*H1, 2*H2)    block-diag [pw2 0; 0 vw2]
    b2_ref,      # (1, 2*H2)
    w3_ref,      # (2*H2, OUT_W)   pw3 -> cols 0:4, vw3 -> col 4
    b3_ref,      # (1, OUT_W)
    s_ref,       # (K_PAD, OUT_W)  mask selector: rows 11:15 -> cols 0:4,
                 #                 row 15 (the ones column) -> cols 4:8
    out_ref,     # (TB, OUT_W)     policy+inf_mask in cols 0:4, value in col 4
):
    x = x_ref[...]

    # Layer 1 (bias folded into w1 via the ones column of x).
    h = jnp.dot(x, w1_ref[...], preferred_element_type=jnp.float32)   # (TB, 512)
    h = jnp.maximum(h, 0.0)

    # Layer 2.
    h = jnp.dot(h, w2_ref[...], preferred_element_type=jnp.float32) + b2_ref[...]
    h = jnp.maximum(h, 0.0)                                           # (TB, 64)

    # Layer 3 (fused policy/value logits).
    logits = jnp.dot(h, w3_ref[...], preferred_element_type=jnp.float32) + b3_ref[...]

    # Action-mask penalty, derived from x (no separate HBM mask stream):
    #   m cols 0:3 = action_mask, cols 4:7 = 1.0  ->  (m - 1) * 1e10 is
    #   0 for legal actions / value lane, -1e10 for illegal actions.
    # NOTE: exact for binary {0,1} masks (what the env / reference produces);
    # replaces clamp(log(mask)) and its EUP transcendentals / NaN hazards.
    m = jnp.dot(x, s_ref[...], preferred_element_type=jnp.float32)    # (TB, OUT_W)
    out_ref[...] = logits + (m - 1.0) * NEG_BIG


# ----------------------------------------------------------------------------
# Weight packing (call ONCE per weight update, not per forward)
# ----------------------------------------------------------------------------
def pack_params(p):
    """Pack the policy/value MLPs into one fused weight chain + mask selector."""
    # Layer 1: [pw1 | vw1] with b1 folded into the extra "ones" row.
    w1 = jnp.concatenate([p["pw1"], p["vw1"]], axis=1)                 # (15, 512)
    b1 = jnp.concatenate([p["pb1"], p["vb1"]], axis=1)                 # (1, 512)
    w1 = jnp.concatenate([w1, b1], axis=0)                             # (16, 512)

    # Layer 2: block-diagonal.
    w2 = jnp.zeros((2 * H1, 2 * H2), jnp.float32)
    w2 = w2.at[:H1, :H2].set(p["pw2"]).at[H1:, H2:].set(p["vw2"])      # (512, 64)
    b2 = jnp.concatenate([p["pb2"], p["vb2"]], axis=1)                 # (1, 64)

    # Layer 3: narrow packed output (policy cols 0:4, value col 4).
    w3 = jnp.zeros((2 * H2, OUT_W), jnp.float32)
    w3 = w3.at[:H2, :NUM_OUTPUTS].set(p["pw3"])
    w3 = w3.at[H2:, NUM_OUTPUTS:NUM_OUTPUTS + 1].set(p["vw3"])         # (64, 8)
    b3 = jnp.zeros((1, OUT_W), jnp.float32)
    b3 = b3.at[:, :NUM_OUTPUTS].set(p["pb3"])
    b3 = b3.at[:, NUM_OUTPUTS:NUM_OUTPUTS + 1].set(p["vb3"])           # (1, 8)

    # Mask selector: x cols 11:14 -> out cols 0:3; ones column -> out cols 4:7.
    s = jnp.zeros((K_PAD, OUT_W), jnp.float32)
    for j in range(NUM_OUTPUTS):
        s = s.at[FEAT - NUM_OUTPUTS + j, j].set(1.0)
    s = s.at[K_PAD - 1, NUM_OUTPUTS:].set(1.0)                         # (16, 8)

    return w1, w2, b2, w3, b3, s


def _round_up(v, m):
    return ((v + m - 1) // m) * m


# ----------------------------------------------------------------------------
# Forward (takes pre-packed params)
# ----------------------------------------------------------------------------
def kuhn_forward(observation, action_history, action_mask, packed_params):
    """Returns (masked_policy_logits (B, num_outputs), value (B,))."""
    B = observation.shape[0]
    feats = jnp.concatenate(
        [observation.reshape(B, -1).astype(jnp.float32),
         action_history.reshape(B, -1).astype(jnp.float32),
         action_mask.astype(jnp.float32)],
        axis=1,
    )
    assert feats.shape == (B, FEAT), feats.shape
    # Pad col 15 with 1.0: bias-fold column for layer 1 and the "legal"
    # constant for the mask selector (out cols >= 4).
    x = jnp.concatenate([feats, jnp.ones((B, 1), jnp.float32)], axis=1)   # (B, 16)

    w1, w2, b2, w3, b3, s = packed_params

    # Batch tile: big enough to amortize per-step overhead, but >= 2 grid
    # steps when B > 8 so the "parallel" axis shards across both TCs on v7x.
    if B <= 8:
        tb = B
    else:
        tb = min(TB_MAX, _round_up(pl.cdiv(B, 2), 8))
    grid = (pl.cdiv(B, tb),)

    batch_spec = lambda width: pl.BlockSpec((tb, width), lambda i: (i, 0))
    const_spec = lambda shape: pl.BlockSpec(shape, lambda i: (0, 0))

    in_specs = [
        batch_spec(K_PAD),                # x (streamed, double-buffered)
        const_spec((K_PAD, 2 * H1)),      # w1  (VMEM-resident across grid steps)
        const_spec((2 * H1, 2 * H2)),     # w2
        const_spec((1, 2 * H2)),          # b2
        const_spec((2 * H2, OUT_W)),      # w3
        const_spec((1, OUT_W)),           # b3
        const_spec((K_PAD, OUT_W)),       # s (mask selector)
    ]
    out_specs = batch_spec(OUT_W)

    weight_elems = (K_PAD * 2 * H1 + 2 * H1 * 2 * H2 + 2 * H2
                    + 2 * H2 * OUT_W + OUT_W + K_PAD * OUT_W)
    cost = pl.CostEstimate(
        flops=2 * B * (K_PAD * 2 * H1 + 2 * H1 * 2 * H2
                       + 2 * H2 * OUT_W + K_PAD * OUT_W),
        transcendentals=0,
        bytes_accessed=4 * (B * (K_PAD + OUT_W) + weight_elems),
    )

    packed = pl.pallas_call(
        _kuhn_kernel,
        out_shape=jax.ShapeDtypeStruct((B, OUT_W), jnp.float32),
        grid=grid,
        in_specs=in_specs,
        out_specs=out_specs,
        compiler_params=pltpu.CompilerParams(
            dimension_semantics=("parallel",),
        ),
        cost_estimate=cost,
    )(x, w1, w2, b2, w3, b3, s)

    policy = packed[:, :NUM_OUTPUTS]
    value = packed[:, NUM_OUTPUTS]          # value_function() flattens -> (B,)
    return policy, value


# ----------------------------------------------------------------------------
# Params + reference
# ----------------------------------------------------------------------------
def init_params(key):
    """Deterministic synthetic init; biases kept 2D (1, N) for TPU layout."""
    ks = jax.random.split(key, 12)

    def lin(kw, kb, fan_in, fan_out):
        bound = 1.0 / jnp.sqrt(fan_in)
        w = jax.random.uniform(kw, (fan_in, fan_out), jnp.float32, -bound, bound)
        b = jax.random.uniform(kb, (1, fan_out), jnp.float32, -bound, bound)
        return w, b

    p = {}
    p["pw1"], p["pb1"] = lin(ks[0], ks[1], FEAT, H1)
    p["pw2"], p["pb2"] = lin(ks[2], ks[3], H1, H2)
    p["pw3"], p["pb3"] = lin(ks[4], ks[5], H2, NUM_OUTPUTS)
    p["vw1"], p["vb1"] = lin(ks[6], ks[7], FEAT, H1)
    p["vw2"], p["vb2"] = lin(ks[8], ks[9], H1, H2)
    p["vw3"], p["vb3"] = lin(ks[10], ks[11], H2, 1)
    return p


def _reference_forward(observation, action_history, action_mask, params):
    B = observation.shape[0]
    x = jnp.concatenate(
        [observation.reshape(B, -1), action_history.reshape(B, -1), action_mask],
        axis=1,
    )

    def mlp(x, w1, b1, w2, b2, w3, b3):
        h = jnp.maximum(x @ w1 + b1, 0.0)
        h = jnp.maximum(h @ w2 + b2, 0.0)
        return h @ w3 + b3

    policy = mlp(x, params["pw1"], params["pb1"], params["pw2"], params["pb2"],
                 params["pw3"], params["pb3"])
    value = mlp(x, params["vw1"], params["vb1"], params["vw2"], params["vb2"],
                params["vw3"], params["vb3"])
    inf_mask = jnp.clip(jnp.log(action_mask), -NEG_BIG, NEG_BIG)
    return policy + inf_mask, value.reshape(-1)


if __name__ == "__main__":
    key = jax.random.PRNGKey(0)
    k_obs, k_hist, k_mask, k_params = jax.random.split(key, 4)

    B = 2
    # Kuhn poker: card one-hot (B, 3), action history (B, 2, 4), mask (B, 4)
    observation = jax.nn.one_hot(
        jax.random.randint(k_obs, (B,), 0, 3), 3, dtype=jnp.float32
    )
    action_history = jax.random.uniform(k_hist, (B, 2, 4), jnp.float32)
    action_mask = (jax.random.uniform(k_mask, (B, NUM_OUTPUTS)) > 0.3).astype(jnp.float32)
    # make sure at least one action is legal per row
    action_mask = action_mask.at[:, 0].set(1.0)

    params = init_params(k_params)
    packed_params = jax.block_until_ready(pack_params(params))  # hoisted: pack once

    policy, value = kuhn_forward(observation, action_history, action_mask, packed_params)
    jax.block_until_ready((policy, value))

    ref_policy, ref_value = _reference_forward(observation, action_history, action_mask, params)
    assert policy.shape == (B, NUM_OUTPUTS)
    assert value.shape == (B,)
    assert jnp.allclose(policy, ref_policy, atol=1e-4, rtol=1e-4)
    assert jnp.allclose(value, ref_value, atol=1e-4, rtol=1e-4)

    print("KERNEL_OK")
</pallas_src>

<mosaic_0001>
module attributes {stable_mosaic.version = 11 : i64} {
  func.func @_kuhn_kernel(%arg0: i32, %arg1: memref<2x16xf32, #tpu.memory_space<vmem>>, %arg2: memref<16x512xf32, #tpu.memory_space<vmem>>, %arg3: memref<512x64xf32, #tpu.memory_space<vmem>>, %arg4: memref<1x64xf32, #tpu.memory_space<vmem>>, %arg5: memref<64x8xf32, #tpu.memory_space<vmem>>, %arg6: memref<1x8xf32, #tpu.memory_space<vmem>>, %arg7: memref<16x8xf32, #tpu.memory_space<vmem>>, %arg8: memref<2x8xf32, #tpu.memory_space<vmem>>) attributes {dimension_semantics = [#tpu.dimension_semantics<parallel>], iteration_bounds = array<i64: 1>, scalar_prefetch = 0 : i64, scratch_operands = 0 : i64, tpu.core_type = #tpu.core_type<tc>, window_params = [{transform_indices = @transform_0, window_bounds = array<i64: 2, 16>}, {pipeline_mode = #tpu.pipeline_mode<synchronous>, transform_indices = @transform_1, window_bounds = array<i64: 16, 512>}, {pipeline_mode = #tpu.pipeline_mode<synchronous>, transform_indices = @transform_2, window_bounds = array<i64: 512, 64>}, {pipeline_mode = #tpu.pipeline_mode<synchronous>, transform_indices = @transform_3, window_bounds = array<i64: 1, 64>}, {pipeline_mode = #tpu.pipeline_mode<synchronous>, transform_indices = @transform_4, window_bounds = array<i64: 64, 8>}, {pipeline_mode = #tpu.pipeline_mode<synchronous>, transform_indices = @transform_5, window_bounds = array<i64: 1, 8>}, {pipeline_mode = #tpu.pipeline_mode<synchronous>, transform_indices = @transform_6, window_bounds = array<i64: 16, 8>}, {transform_indices = @transform_7, window_bounds = array<i64: 2, 8>}]} {
    %c0 = arith.constant 0 : index
    %c0_0 = arith.constant 0 : index
    %0 = vector.load %arg1[%c0, %c0_0] : memref<2x16xf32, #tpu.memory_space<vmem>>, vector<2x16xf32>
    %c0_1 = arith.constant 0 : index
    %c0_2 = arith.constant 0 : index
    %1 = vector.load %arg2[%c0_1, %c0_2] : memref<16x512xf32, #tpu.memory_space<vmem>>, vector<16x512xf32>
    %cst = arith.constant dense<0.000000e+00> : vector<2x512xf32>
    %2 = tpu.matmul %0, %1, %cst {dimension_numbers = #tpu.dot_dimension_numbers<[1], [0], [0], [1], [0, 0, 1, 1], [], []>} : vector<2x16xf32>, vector<16x512xf32>, vector<2x512xf32> -> vector<2x512xf32>
    %cst_3 = arith.constant 0.000000e+00 : f32
    %3 = vector.broadcast %cst_3 : f32 to vector<2x512xf32>
    %4 = arith.maximumf %2, %3 : vector<2x512xf32>
    %c0_4 = arith.constant 0 : index
    %c0_5 = arith.constant 0 : index
    %5 = vector.load %arg3[%c0_4, %c0_5] : memref<512x64xf32, #tpu.memory_space<vmem>>, vector<512x64xf32>
    %cst_6 = arith.constant dense<0.000000e+00> : vector<2x64xf32>
    %6 = tpu.matmul %4, %5, %cst_6 {dimension_numbers = #tpu.dot_dimension_numbers<[1], [0], [0], [1], [0, 0, 1, 1], [], []>} : vector<2x512xf32>, vector<512x64xf32>, vector<2x64xf32> -> vector<2x64xf32>
    %c0_7 = arith.constant 0 : index
    %c0_8 = arith.constant 0 : index
    %7 = vector.load %arg4[%c0_7, %c0_8] : memref<1x64xf32, #tpu.memory_space<vmem>>, vector<1x64xf32>
    %8 = vector.broadcast %7 : vector<1x64xf32> to vector<2x64xf32>
    %9 = arith.addf %6, %8 : vector<2x64xf32>
    %cst_9 = arith.constant 0.000000e+00 : f32
    %10 = vector.broadcast %cst_9 : f32 to vector<2x64xf32>
    %11 = arith.maximumf %9, %10 : vector<2x64xf32>
    %c0_10 = arith.constant 0 : index
    %c0_11 = arith.constant 0 : index
    %12 = vector.load %arg5[%c0_10, %c0_11] : memref<64x8xf32, #tpu.memory_space<vmem>>, vector<64x8xf32>
    %cst_12 = arith.constant dense<0.000000e+00> : vector<2x8xf32>
    %13 = tpu.matmul %11, %12, %cst_12 {dimension_numbers = #tpu.dot_dimension_numbers<[1], [0], [0], [1], [0, 0, 1, 1], [], []>} : vector<2x64xf32>, vector<64x8xf32>, vector<2x8xf32> -> vector<2x8xf32>
    %c0_13 = arith.constant 0 : index
    %c0_14 = arith.constant 0 : index
    %14 = vector.load %arg6[%c0_13, %c0_14] : memref<1x8xf32, #tpu.memory_space<vmem>>, vector<1x8xf32>
    %15 = vector.broadcast %14 : vector<1x8xf32> to vector<2x8xf32>
    %16 = arith.addf %13, %15 : vector<2x8xf32>
    %c0_15 = arith.constant 0 : index
    %c0_16 = arith.constant 0 : index
    %17 = vector.load %arg7[%c0_15, %c0_16] : memref<16x8xf32, #tpu.memory_space<vmem>>, vector<16x8xf32>
    %cst_17 = arith.constant dense<0.000000e+00> : vector<2x8xf32>
    %18 = tpu.matmul %0, %17, %cst_17 {dimension_numbers = #tpu.dot_dimension_numbers<[1], [0], [0], [1], [0, 0, 1, 1], [], []>} : vector<2x16xf32>, vector<16x8xf32>, vector<2x8xf32> -> vector<2x8xf32>
    %cst_18 = arith.constant 1.000000e+00 : f32
    %19 = vector.broadcast %cst_18 : f32 to vector<2x8xf32>
    %20 = arith.subf %18, %19 : vector<2x8xf32>
    %cst_19 = arith.constant 1.000000e+10 : f32
    %21 = vector.broadcast %cst_19 : f32 to vector<2x8xf32>
    %22 = arith.mulf %20, %21 : vector<2x8xf32>
    %23 = arith.addf %16, %22 : vector<2x8xf32>
    %c0_20 = arith.constant 0 : index
    %c0_21 = arith.constant 0 : index
    %24 = vector.load %arg8[%c0_20, %c0_21] : memref<2x8xf32, #tpu.memory_space<vmem>>, vector<2x8xf32>
    tpu.vector_store %arg8[%c0_20, %c0_21], %23 {strides = array<i32>} : memref<2x8xf32, #tpu.memory_space<vmem>>, vector<2x8xf32>,
    return
  }
  func.func @transform_0(%arg0: i32) -> (i32, i32) {
    %c0_i32 = arith.constant 0 : i32
    %c0_i32_0 = arith.constant 0 : i32
    return %arg0, %c0_i32 : i32, i32
  }
  func.func @transform_1(%arg0: i32) -> (i32, i32) {
    %c0_i32 = arith.constant 0 : i32
    %c0_i32_0 = arith.constant 0 : i32
    %c0_i32_1 = arith.constant 0 : i32
    return %c0_i32, %c0_i32_0 : i32, i32
  }
  func.func @transform_2(%arg0: i32) -> (i32, i32) {
    %c0_i32 = arith.constant 0 : i32
    %c0_i32_0 = arith.constant 0 : i32
    %c0_i32_1 = arith.constant 0 : i32
    return %c0_i32, %c0_i32_0 : i32, i32
  }
  func.func @transform_3(%arg0: i32) -> (i32, i32) {
    %c0_i32 = arith.constant 0 : i32
    %c0_i32_0 = arith.constant 0 : i32
    %c0_i32_1 = arith.constant 0 : i32
    return %c0_i32, %c0_i32_0 : i32, i32
  }
  func.func @transform_4(%arg0: i32) -> (i32, i32) {
    %c0_i32 = arith.constant 0 : i32
    %c0_i32_0 = arith.constant 0 : i32
    %c0_i32_1 = arith.constant 0 : i32
    return %c0_i32, %c0_i32_0 : i32, i32
  }
  func.func @transform_5(%arg0: i32) -> (i32, i32) {
    %c0_i32 = arith.constant 0 : i32
    %c0_i32_0 = arith.constant 0 : i32
    %c0_i32_1 = arith.constant 0 : i32
    return %c0_i32, %c0_i32_0 : i32, i32
  }
  func.func @transform_6(%arg0: i32) -> (i32, i32) {
    %c0_i32 = arith.constant 0 : i32
    %c0_i32_0 = arith.constant 0 : i32
    %c0_i32_1 = arith.constant 0 : i32
    return %c0_i32, %c0_i32_0 : i32, i32
  }
  func.func @transform_7(%arg0: i32) -> (i32, i32) {
    %c0_i32 = arith.constant 0 : i32
    %c0_i32_0 = arith.constant 0 : i32
    return %arg0, %c0_i32 : i32, i32
  }
}

</mosaic_0001>

<llo_original>
// kernel: tpu_custom_call.1
$region0: #{tpu_custom_call.1}
  #allocation0 [shape = 'u32[]', space=smem, size = 0x4, offset = 0x4, fixed_abs, tag = 'smem constant byte address 0x4 - core index']
  #allocation1 [shape = 'u32[144,128]{1,0:T(1,128)}', space=vmem, size = 0x12000, scoped, tag = 'internal scratch']
  %s0 = inlined_call_operand.vmem [shape: f32[2,16], index: 0, kind: input, shape index: {}]
  %s1 = inlined_call_operand.vmem [shape: f32[16,512], index: 1, kind: input, shape index: {}]
  %s2 = inlined_call_operand.vmem [shape: f32[512,64], index: 2, kind: input, shape index: {}]
  %s3 = inlined_call_operand.vmem [shape: f32[1,64], index: 3, kind: input, shape index: {}]
  %s4 = inlined_call_operand.vmem [shape: f32[64,8], index: 4, kind: input, shape index: {}]
  %s5 = inlined_call_operand.vmem [shape: f32[1,8], index: 5, kind: input, shape index: {}]
  %s6 = inlined_call_operand.vmem [shape: f32[16,8], index: 6, kind: input, shape index: {}]
  %s7 = inlined_call_operand.hbm [shape: f32[2,8], index: 7, kind: output, shape index: {}]
  %s8 = sld [smem:[#allocation0]]
  $region38: #{tpu_custom_call.1} parent=0
    _
  %s10 = ssub.s32 1, %s8
  %s11 = scalar_select 0, %s10, %s8
  $region1: #{tpu_custom_call.1} parent=0
    #allocation2 [shape = 'u8[1024]{0}', space=vmem, size = 0x400, scoped, tag = 'output window, operand 0, single buffered']
    #allocation3 [shape = 's32[1]{0}', space=sflag, size = 0x4, scoped, tag = 'scoped memory for tpu_custom_call.1']
    %12 = vsyncpa [#allocation3], 0
    // Predicated region
    $region2: #{tpu_custom_call.1} parent=1 // pred_check
      _
    $region3: #{tpu_custom_call.1} parent=1 // pred_check_branch
      %14 = sbr.rel (0) target = $region5
    $region4: #{tpu_custom_call.1} parent=1 // pred_region
      _
    $region5: #{tpu_custom_call.1} parent=1 // pred_fallthru
      _
    // Predicated region
    $region6: #{tpu_custom_call.1} parent=1 // pred_check
      _
    $region7: #{tpu_custom_call.1} parent=1 // pred_check_branch
      %16 = sbr.rel (0) target = $region9
    $region8: #{tpu_custom_call.1} parent=1 // pred_region
      _
    $region9: #{tpu_custom_call.1} parent=1 // pred_fallthru
      _
    // Predicated region
    $region10: #{tpu_custom_call.1} parent=1 // pred_check
      _
    $region11: #{tpu_custom_call.1} parent=1 // pred_check_branch
      %18 = sbr.rel (0) target = $region13
    $region12: #{tpu_custom_call.1} parent=1 // pred_region
      _
    $region13: #{tpu_custom_call.1} parent=1 // pred_fallthru
      _
    // Predicated region
    $region14: #{tpu_custom_call.1} parent=1 // pred_check
      _
    $region15: #{tpu_custom_call.1} parent=1 // pred_check_branch
      %20 = sbr.rel (0) target = $region17
    $region16: #{tpu_custom_call.1} parent=1 // pred_region
      _
    $region17: #{tpu_custom_call.1} parent=1 // pred_fallthru
      _
    // Predicated region
    $region18: #{tpu_custom_call.1} parent=1 // pred_check
      _
    $region19: #{tpu_custom_call.1} parent=1 // pred_check_branch
      %22 = sbr.rel (0) target = $region21
    $region20: #{tpu_custom_call.1} parent=1 // pred_region
      _
    $region21: #{tpu_custom_call.1} parent=1 // pred_fallthru
      _
    // Predicated region
    $region22: #{tpu_custom_call.1} parent=1 // pred_check
      _
    $region23: #{tpu_custom_call.1} parent=1 // pred_check_branch
      %24 = sbr.rel (0) target = $region25
    $region24: #{tpu_custom_call.1} parent=1 // pred_region
      _
    $region25: #{tpu_custom_call.1} parent=1 // pred_fallthru
      _
    // Predicated region
    $region26: #{tpu_custom_call.1} parent=1 // pred_check
      _
    $region27: #{tpu_custom_call.1} parent=1 // pred_check_branch
      %26 = sbr.rel (0) target = $region29
    $region28: #{tpu_custom_call.1} parent=1 // pred_region
      _
    $region29: #{tpu_custom_call.1} parent=1 // pred_fallthru
      _
    %v27 = vld [vmem:[%s0] sm:$0x3]
    %v28 = vld [vmem:[%s1] sm:$0xff]
    %v29 = vld [vmem:[%s1 + $0x8] sm:$0xff]
    %v30 = vld [vmem:[%s1 + $0x10] sm:$0xff]
    %v31 = vld [vmem:[%s1 + $0x18] sm:$0xff]
    %v32 = vld [vmem:[%s1 + $0x20] sm:$0xff]
    %v33 = vld [vmem:[%s1 + $0x28] sm:$0xff]
    %v34 = vld [vmem:[%s1 + $0x30] sm:$0xff]
    %v35 = vld [vmem:[%s1 + $0x38] sm:$0xff]
    %vm36 = vcmask 130048
    %v38 = vsel %vm36, %v27, 0
    %40 = vmatprep.subr.mxu0 %v29
    %41 = vmatpush1.msra.mxu0 %v28
    %42 = vmatprep.subr.mxu0 %v33
    %43 = vmatpush1.msra.mxu0 %v32
    %44 = vmatprep.subr.mxu0 0.0
    %45 = vmatpush1.msra.mxu0 0.0
    %46 = vmatprep.subr.mxu0 0.0
    %47 = vmatpush1.msra.mxu0 0.0
    %48 = vmatprep.subr.mxu0 0.0
    %49 = vmatpush1.msra.mxu0 0.0
    %50 = vmatprep.subr.mxu0 0.0
    %51 = vmatpush1.msra.mxu0 0.0
    %52 = vmatprep.subr.mxu0 0.0
    %53 = vmatpush1.msra.mxu0 0.0
    %54 = vmatprep.subr.mxu0 0.0
    %55 = vmatpush1.msra.mxu0 0.0
    %56 = vmatprep.subr.mxu0 0.0
    %57 = vmatpush1.msra.mxu0 0.0
    %58 = vmatprep.subr.mxu0 0.0
    %59 = vmatpush1.msra.mxu0 0.0
    %60 = vmatprep.subr.mxu0 0.0
    %61 = vmatpush1.msra.mxu0 0.0
    %62 = vmatprep.subr.mxu0 0.0
    %63 = vmatpush1.msra.mxu0 0.0
    %64 = vmatprep.subr.mxu0 0.0
    %65 = vmatpush1.msra.mxu0 0.0
    %66 = vmatprep.subr.mxu0 0.0
    %67 = vmatpush1.msra.mxu0 0.0
    %68 = vmatprep.subr.mxu0 0.0
    %69 = vmatpush1.msra.mxu0 0.0
    %70 = vmatprep.subr.mxu0 0.0
    %71 = vmatpush1.msra.mxu0 0.0
    %72 = vmatprep.subr.mxu0 0.0
    %73 = vmatpush1.msra.mxu0 0.0
    %74 = vmatprep.subr.mxu0 0.0
    %75 = vmatpush1.msra.mxu0 0.0
    %76 = vmatprep.subr.mxu0 0.0
    %77 = vmatpush1.msra.mxu0 0.0
    %78 = vmatprep.subr.mxu0 0.0
    %79 = vmatpush1.msra.mxu0 0.0
    %80 = vmatprep.subr.mxu0 0.0
    %81 = vmatpush1.msra.mxu0 0.0
    %82 = vmatprep.subr.mxu0 0.0
    %83 = vmatpush1.msra.mxu0 0.0
    %84 = vmatprep.subr.mxu0 0.0
    %85 = vmatpush1.msra.mxu0 0.0
    %86 = vmatprep.subr.mxu0 0.0
    %87 = vmatpush1.msra.mxu0 0.0
    %88 = vmatprep.subr.mxu0 0.0
    %89 = vmatpush1.msra.mxu0 0.0
    %90 = vmatprep.subr.mxu0 0.0
    %91 = vmatpush1.msra.mxu0 0.0
    %92 = vmatprep.subr.mxu0 0.0
    %93 = vmatpush1.msra.mxu0 0.0
    %94 = vmatprep.subr.mxu0 0.0
    %95 = vmatpush1.msra.mxu0 0.0
    %96 = vmatprep.subr.mxu0 0.0
    %97 = vmatpush1.msra.mxu0 0.0
    %98 = vmatprep.subr.mxu0 0.0
    %99 = vmatpush1.msra.mxu0 0.0
    %100 = vmatprep.subr.mxu0 0.0
    %101 = vmatpush1.msra.mxu0 0.0
    %102 = vmatprep.subr.mxu0 0.0
    %103 = vmatpush1.msra.mxu0 0.0
    %104 = vmatprep.mubr.f32.mxu0 0.0
    %105 = vmatmul.mubr.f32.gmra.mrb[0].mxu0 %v38
    %v106 = vpop.f32.mrb[0].mxu0
    %v107 = vadd.f32 0.0, %v106
    %v108 = vpop.f32.mrb[0].mxu0
    %v109 = vadd.f32 0.0, %v108
    %110 = vdwg.mxu0
    %111 = vmatprep.subr.mxu0 %v31
    %112 = vmatpush1.msra.mxu0 %v30
    %113 = vmatprep.subr.mxu0 %v35
    %114 = vmatpush1.msra.mxu0 %v34
    %115 = vmatprep.subr.mxu0 0.0
    %116 = vmatpush1.msra.mxu0 0.0
    %117 = vmatprep.subr.mxu0 0.0
    %118 = vmatpush1.msra.mxu0 0.0
    %119 = vmatprep.subr.mxu0 0.0
    %120 = vmatpush1.msra.mxu0 0.0
    %121 = vmatprep.subr.mxu0 0.0
    %122 = vmatpush1.msra.mxu0 0.0
    %123 = vmatprep.subr.mxu0 0.0
    %124 = vmatpush1.msra.mxu0 0.0
    %125 = vmatprep.subr.mxu0 0.0
    %126 = vmatpush1.msra.mxu0 0.0
    %127 = vmatprep.subr.mxu0 0.0
    %128 = vmatpush1.msra.mxu0 0.0
    %129 = vmatprep.subr.mxu0 0.0
    %130 = vmatpush1.msra.mxu0 0.0
    %131 = vmatprep.subr.mxu0 0.0
    %132 = vmatpush1.msra.mxu0 0.0
    %133 = vmatprep.subr.mxu0 0.0
    %134 = vmatpush1.msra.mxu0 0.0
    %135 = vmatprep.subr.mxu0 0.0
    %136 = vmatpush1.msra.mxu0 0.0
    %137 = vmatprep.subr.mxu0 0.0
    %138 = vmatpush1.msra.mxu0 0.0
    %139 = vmatprep.subr.mxu0 0.0
    %140 = vmatpush1.msra.mxu0 0.0
    %141 = vmatprep.subr.mxu0 0.0
    %142 = vmatpush1.msra.mxu0 0.0
    %143 = vmatprep.subr.mxu0 0.0
    %144 = vmatpush1.msra.mxu0 0.0
    %145 = vmatprep.subr.mxu0 0.0
    %146 = vmatpush1.msra.mxu0 0.0
    %147 = vmatprep.subr.mxu0 0.0
    %148 = vmatpush1.msra.mxu0 0.0
    %149 = vmatprep.subr.mxu0 0.0
    %150 = vmatpush1.msra.mxu0 0.0
    %151 = vmatprep.subr.mxu0 0.0
    %152 = vmatpush1.msra.mxu0 0.0
    %153 = vmatprep.subr.mxu0 0.0
    %154 = vmatpush1.msra.mxu0 0.0
    %155 = vmatprep.subr.mxu0 0.0
    %156 = vmatpush1.msra.mxu0 0.0
    %157 = vmatprep.subr.mxu0 0.0
    %158 = vmatpush1.msra.mxu0 0.0
    %159 = vmatprep.subr.mxu0 0.0
    %160 = vmatpush1.msra.mxu0 0.0
    %161 = vmatprep.subr.mxu0 0.0
    %162 = vmatpush1.msra.mxu0 0.0
    %163 = vmatprep.subr.mxu0 0.0
    %164 = vmatpush1.msra.mxu0 0.0
    %165 = vmatprep.subr.mxu0 0.0
    %166 = vmatpush1.msra.mxu0 0.0
    %167 = vmatprep.subr.mxu0 0.0
    %168 = vmatpush1.msra.mxu0 0.0
    %169 = vmatprep.subr.mxu0 0.0
    %170 = vmatpush1.msra.mxu0 0.0
    %171 = vmatprep.subr.mxu0 0.0
    %172 = vmatpush1.msra.mxu0 0.0
    %173 = vmatprep.subr.mxu0 0.0
    %174 = vmatpush1.msra.mxu0 0.0
    %175 = vmatprep.mubr.f32.mxu0 0.0
    %176 = vmatmul.mubr.f32.gmra.mrb[0].mxu0 %v38
    %v177 = vpop.f32.mrb[0].mxu0
    %v178 = vadd.f32 0.0, %v177
    %v179 = vpop.f32.mrb[0].mxu0
    %v180 = vadd.f32 0.0, %v179
    %181 = vdwg.mxu0
    %v182 = vmax.f32 %v107, 0.0
    %v183 = vmax.f32 %v109, 0.0
    %v184 = vmax.f32 %v178, 0.0
    %v185 = vmax.f32 %v180, 0.0
    %v186 = vld [vmem:[%s2] sm:$0xff]
    %v187 = vld [vmem:[%s2 + $0x8] sm:$0xff]
    %v188 = vld [vmem:[%s2 + $0x10] sm:$0xff]
    %v189 = vld [vmem:[%s2 + $0x18] sm:$0xff]
    %v190 = vld [vmem:[%s2 + $0x20] sm:$0xff]
    %v191 = vld [vmem:[%s2 + $0x28] sm:$0xff]
    %v192 = vld [vmem:[%s2 + $0x30] sm:$0xff]
    %v193 = vld [vmem:[%s2 + $0x38] sm:$0xff]
    %v194 = vld [vmem:[%s2 + $0x40] sm:$0xff]
    %v195 = vld [vmem:[%s2 + $0x48] sm:$0xff]
    %v196 = vld [vmem:[%s2 + $0x50] sm:$0xff]
    %v197 = vld [vmem:[%s2 + $0x58] sm:$0xff]
    %v198 = vld [vmem:[%s2 + $0x60] sm:$0xff]
    %v199 = vld [vmem:[%s2 + $0x68] sm:$0xff]
    %v200 = vld [vmem:[%s2 + $0x70] sm:$0xff]
    %v201 = vld [vmem:[%s2 + $0x78] sm:$0xff]
    %v202 = vld [vmem:[%s2 + $0x80] sm:$0xff]
    %v203 = vld [vmem:[%s2 + $0x88] sm:$0xff]
    %v204 = vld [vmem:[%s2 + $0x90] sm:$0xff]
    %v205 = vld [vmem:[%s2 + $0x98] sm:$0xff]
    %v206 = vld [vmem:[%s2 + $0xa0] sm:$0xff]
    %v207 = vld [vmem:[%s2 + $0xa8] sm:$0xff]
    %v208 = vld [vmem:[%s2 + $0xb0] sm:$0xff]
    %v209 = vld [vmem:[%s2 + $0xb8] sm:$0xff]
    %v210 = vld [vmem:[%s2 + $0xc0] sm:$0xff]
    %v211 = vld [vmem:[%s2 + $0xc8] sm:$0xff]
    %v212 = vld [vmem:[%s2 + $0xd0] sm:$0xff]
    %v213 = vld [vmem:[%s2 + $0xd8] sm:$0xff]
    %v214 = vld [vmem:[%s2 + $0xe0] sm:$0xff]
    %v215 = vld [vmem:[%s2 + $0xe8] sm:$0xff]
    %v216 = vld [vmem:[%s2 + $0xf0] sm:$0xff]
    %v217 = vld [vmem:[%s2 + $0xf8] sm:$0xff]
    %v218 = vld [vmem:[%s2 + $0x100] sm:$0xff]
    %v219 = vld [vmem:[%s2 + $0x108] sm:$0xff]
    %v220 = vld [vmem:[%s2 + $0x110] sm:$0xff]
    %v221 = vld [vmem:[%s2 + $0x118] sm:$0xff]
    %v222 = vld [vmem:[%s2 + $0x120] sm:$0xff]
    %v223 = vld [vmem:[%s2 + $0x128] sm:$0xff]
    %v224 = vld [vmem:[%s2 + $0x130] sm:$0xff]
    %v225 = vld [vmem:[%s2 + $0x138] sm:$0xff]
    %v226 = vld [vmem:[%s2 + $0x140] sm:$0xff]
    %v227 = vld [vmem:[%s2 + $0x148] sm:$0xff]
    %v228 = vld [vmem:[%s2 + $0x150] sm:$0xff]
    %v229 = vld [vmem:[%s2 + $0x158] sm:$0xff]
    %v230 = vld [vmem:[%s2 + $0x160] sm:$0xff]
    %v231 = vld [vmem:[%s2 + $0x168] sm:$0xff]
    %v232 = vld [vmem:[%s2 + $0x170] sm:$0xff]
    %v233 = vld [vmem:[%s2 + $0x178] sm:$0xff]
    %v234 = vld [vmem:[%s2 + $0x180] sm:$0xff]
    %v235 = vld [vmem:[%s2 + $0x188] sm:$0xff]
    %v236 = vld [vmem:[%s2 + $0x190] sm:$0xff]
    %v237 = vld [vmem:[%s2 + $0x198] sm:$0xff]
    %v238 = vld [vmem:[%s2 + $0x1a0] sm:$0xff]
    %v239 = vld [vmem:[%s2 + $0x1a8] sm:$0xff]
    %v240 = vld [vmem:[%s2 + $0x1b0] sm:$0xff]
    %v241 = vld [vmem:[%s2 + $0x1b8] sm:$0xff]
    %v242 = vld [vmem:[%s2 + $0x1c0] sm:$0xff]
    %v243 = vld [vmem:[%s2 + $0x1c8] sm:$0xff]
    %v244 = vld [vmem:[%s2 + $0x1d0] sm:$0xff]
    %v245 = vld [vmem:[%s2 + $0x1d8] sm:$0xff]
    %v246 = vld [vmem:[%s2 + $0x1e0] sm:$0xff]
    %v247 = vld [vmem:[%s2 + $0x1e8] sm:$0xff]
    %v248 = vld [vmem:[%s2 + $0x1f0] sm:$0xff]
    %v249 = vld [vmem:[%s2 + $0x1f8] sm:$0xff]
    %v250 = vld [vmem:[%s3] sm:$0x1]
    %v252 = vlaneseq
    %v253 = vshrl.u32 %v252, 7
    %v254 = vsub.s32 0, %v253
    %v255 = vrot.slane %v250, %v254
    %257 = vmatprep.subr.mxu0 0.0
    %258 = vmatpush1.msra.mxu0 %v186
    %259 = vmatprep.subr.mxu0 0.0
    %260 = vmatpush1.msra.mxu0 %v187
    %261 = vmatprep.subr.mxu0 0.0
    %262 = vmatpush1.msra.mxu0 %v188
    %263 = vmatprep.subr.mxu0 0.0
    %264 = vmatpush1.msra.mxu0 %v189
    %265 = vmatprep.subr.mxu0 0.0
    %266 = vmatpush1.msra.mxu0 %v190
    %267 = vmatprep.subr.mxu0 0.0
    %268 = vmatpush1.msra.mxu0 %v191
    %269 = vmatprep.subr.mxu0 0.0
    %270 = vmatpush1.msra.mxu0 %v192
    %271 = vmatprep.subr.mxu0 0.0
    %272 = vmatpush1.msra.mxu0 %v193
    %273 = vmatprep.subr.mxu0 0.0
    %274 = vmatpush1.msra.mxu0 %v194
    %275 = vmatprep.subr.mxu0 0.0
    %276 = vmatpush1.msra.mxu0 %v195
    %277 = vmatprep.subr.mxu0 0.0
    %278 = vmatpush1.msra.mxu0 %v196
    %279 = vmatprep.subr.mxu0 0.0
    %280 = vmatpush1.msra.mxu0 %v197
    %281 = vmatprep.subr.mxu0 0.0
    %282 = vmatpush1.msra.mxu0 %v198
    %283 = vmatprep.subr.mxu0 0.0
    %284 = vmatpush1.msra.mxu0 %v199
    %285 = vmatprep.subr.mxu0 0.0
    %286 = vmatpush1.msra.mxu0 %v200
    %287 = vmatprep.subr.mxu0 0.0
    %288 = vmatpush1.msra.mxu0 %v201
    %289 = vmatprep.subr.mxu0 0.0
    %290 = vmatpush1.msra.mxu0 %v202
    %291 = vmatprep.subr.mxu0 0.0
    %292 = vmatpush1.msra.mxu0 %v203
    %293 = vmatprep.subr.mxu0 0.0
    %294 = vmatpush1.msra.mxu0 %v204
    %295 = vmatprep.subr.mxu0 0.0
    %296 = vmatpush1.msra.mxu0 %v205
    %297 = vmatprep.subr.mxu0 0.0
    %298 = vmatpush1.msra.mxu0 %v206
    %299 = vmatprep.subr.mxu0 0.0
    %300 = vmatpush1.msra.mxu0 %v207
    %301 = vmatprep.subr.mxu0 0.0
    %302 = vmatpush1.msra.mxu0 %v208
    %303 = vmatprep.subr.mxu0 0.0
    %304 = vmatpush1.msra.mxu0 %v209
    %305 = vmatprep.subr.mxu0 0.0
    %306 = vmatpush1.msra.mxu0 %v210
    %307 = vmatprep.subr.mxu0 0.0
    %308 = vmatpush1.msra.mxu0 %v211
    %309 = vmatprep.subr.mxu0 0.0
    %310 = vmatpush1.msra.mxu0 %v212
    %311 = vmatprep.subr.mxu0 0.0
    %312 = vmatpush1.msra.mxu0 %v213
    %313 = vmatprep.subr.mxu0 0.0
    %314 = vmatpush1.msra.mxu0 %v214
    %315 = vmatprep.subr.mxu0 0.0
    %316 = vmatpush1.msra.mxu0 %v215
    %317 = vmatprep.subr.mxu0 0.0
    %318 = vmatpush1.msra.mxu0 %v216
    %319 = vmatprep.subr.mxu0 0.0
    %320 = vmatpush1.msra.mxu0 %v217
    %321 = vmatprep.mubr.f32.mxu0 %v183
    %322 = vmatmul.mubr.f32.gmra.mrb[0].mxu0 %v182
    %v323 = vpop.f32.mrb[0].mxu0
    %v324 = vadd.f32 %v255, %v323
    %v325 = vpop.f32.mrb[0].mxu0
    %326 = vdwg.mxu0
    %327 = vmatprep.subr.mxu0 0.0
    %328 = vmatpush1.msra.mxu0 %v218
    %329 = vmatprep.subr.mxu0 0.0
    %330 = vmatpush1.msra.mxu0 %v219
    %331 = vmatprep.subr.mxu0 0.0
    %332 = vmatpush1.msra.mxu0 %v220
    %333 = vmatprep.subr.mxu0 0.0
    %334 = vmatpush1.msra.mxu0 %v221
    %335 = vmatprep.subr.mxu0 0.0
    %336 = vmatpush1.msra.mxu0 %v222
    %337 = vmatprep.subr.mxu0 0.0
    %338 = vmatpush1.msra.mxu0 %v223
    %339 = vmatprep.subr.mxu0 0.0
    %340 = vmatpush1.msra.mxu0 %v224
    %341 = vmatprep.subr.mxu0 0.0
    %342 = vmatpush1.msra.mxu0 %v225
    %343 = vmatprep.subr.mxu0 0.0
    %344 = vmatpush1.msra.mxu0 %v226
    %345 = vmatprep.subr.mxu0 0.0
    %346 = vmatpush1.msra.mxu0 %v227
    %347 = vmatprep.subr.mxu0 0.0
    %348 = vmatpush1.msra.mxu0 %v228
    %349 = vmatprep.subr.mxu0 0.0
    %350 = vmatpush1.msra.mxu0 %v229
    %351 = vmatprep.subr.mxu0 0.0
    %352 = vmatpush1.msra.mxu0 %v230
    %353 = vmatprep.subr.mxu0 0.0
    %354 = vmatpush1.msra.mxu0 %v231
    %355 = vmatprep.subr.mxu0 0.0
    %356 = vmatpush1.msra.mxu0 %v232
    %357 = vmatprep.subr.mxu0 0.0
    %358 = vmatpush1.msra.mxu0 %v233
    %359 = vmatprep.subr.mxu0 0.0
    %360 = vmatpush1.msra.mxu0 %v234
    %361 = vmatprep.subr.mxu0 0.0
    %362 = vmatpush1.msra.mxu0 %v235
    %363 = vmatprep.subr.mxu0 0.0
    %364 = vmatpush1.msra.mxu0 %v236
    %365 = vmatprep.subr.mxu0 0.0
    %366 = vmatpush1.msra.mxu0 %v237
    %367 = vmatprep.subr.mxu0 0.0
    %368 = vmatpush1.msra.mxu0 %v238
    %369 = vmatprep.subr.mxu0 0.0
    %370 = vmatpush1.msra.mxu0 %v239
    %371 = vmatprep.subr.mxu0 0.0
    %372 = vmatpush1.msra.mxu0 %v240
    %373 = vmatprep.subr.mxu0 0.0
    %374 = vmatpush1.msra.mxu0 %v241
    %375 = vmatprep.subr.mxu0 0.0
    %376 = vmatpush1.msra.mxu0 %v242
    %377 = vmatprep.subr.mxu0 0.0
    %378 = vmatpush1.msra.mxu0 %v243
    %379 = vmatprep.subr.mxu0 0.0
    %380 = vmatpush1.msra.mxu0 %v244
    %381 = vmatprep.subr.mxu0 0.0
    %382 = vmatpush1.msra.mxu0 %v245
    %383 = vmatprep.subr.mxu0 0.0
    %384 = vmatpush1.msra.mxu0 %v246
    %385 = vmatprep.subr.mxu0 0.0
    %386 = vmatpush1.msra.mxu0 %v247
    %387 = vmatprep.subr.mxu0 0.0
    %388 = vmatpush1.msra.mxu0 %v248
    %389 = vmatprep.subr.mxu0 0.0
    %390 = vmatpush1.msra.mxu0 %v249
    %391 = vmatprep.mubr.f32.mxu0 %v185
    %392 = vmatmul.mubr.f32.gmra.mrb[0].mxu0 %v184
    %v393 = vpop.f32.mrb[0].mxu0
    %v394 = vadd.f32 %v324, %v393
    %v395 = vpop.f32.mrb[0].mxu0
    %396 = vdwg.mxu0
    %v397 = vmax.f32 %v394, 0.0
    %v398 = vld [vmem:[%s4] sm:$0xff]
    %v399 = vld [vmem:[%s4 + $0x8] sm:$0xff]
    %v400 = vld [vmem:[%s4 + $0x10] sm:$0xff]
    %v401 = vld [vmem:[%s4 + $0x18] sm:$0xff]
    %v402 = vld [vmem:[%s4 + $0x20] sm:$0xff]
    %v403 = vld [vmem:[%s4 + $0x28] sm:$0xff]
    %v404 = vld [vmem:[%s4 + $0x30] sm:$0xff]
    %v405 = vld [vmem:[%s4 + $0x38] sm:$0xff]
    %v406 = vld [vmem:[%s5] sm:$0x1]
    %v408 = vlaneseq
    %v409 = vshrl.u32 %v408, 7
    %v410 = vsub.s32 0, %v409
    %v411 = vrot.slane %v406, %v410
    %vm413 = vcmask 523264
    %v415 = vsel %vm413, %v397, 0
    %417 = vmatprep.subr.mxu0 0.0
    %418 = vmatpush1.msra.mxu0 %v398
    %419 = vmatprep.subr.mxu0 0.0
    %420 = vmatpush1.msra.mxu0 %v399
    %421 = vmatprep.subr.mxu0 0.0
    %422 = vmatpush1.msra.mxu0 %v400
    %423 = vmatprep.subr.mxu0 0.0
    %424 = vmatpush1.msra.mxu0 %v401
    %425 = vmatprep.subr.mxu0 0.0
    %426 = vmatpush1.msra.mxu0 %v402
    %427 = vmatprep.subr.mxu0 0.0
    %428 = vmatpush1.msra.mxu0 %v403
    %429 = vmatprep.subr.mxu0 0.0
    %430 = vmatpush1.msra.mxu0 %v404
    %431 = vmatprep.subr.mxu0 0.0
    %432 = vmatpush1.msra.mxu0 %v405
    %433 = vmatprep.subr.mxu0 0.0
    %434 = vmatpush1.msra.mxu0 0.0
    %435 = vmatprep.subr.mxu0 0.0
    %436 = vmatpush1.msra.mxu0 0.0
    %437 = vmatprep.subr.mxu0 0.0
    %438 = vmatpush1.msra.mxu0 0.0
    %439 = vmatprep.subr.mxu0 0.0
    %440 = vmatpush1.msra.mxu0 0.0
    %441 = vmatprep.subr.mxu0 0.0
    %442 = vmatpush1.msra.mxu0 0.0
    %443 = vmatprep.subr.mxu0 0.0
    %444 = vmatpush1.msra.mxu0 0.0
    %445 = vmatprep.subr.mxu0 0.0
    %446 = vmatpush1.msra.mxu0 0.0
    %447 = vmatprep.subr.mxu0 0.0
    %448 = vmatpush1.msra.mxu0 0.0
    %449 = vmatprep.subr.mxu0 0.0
    %450 = vmatpush1.msra.mxu0 0.0
    %451 = vmatprep.subr.mxu0 0.0
    %452 = vmatpush1.msra.mxu0 0.0
    %453 = vmatprep.subr.mxu0 0.0
    %454 = vmatpush1.msra.mxu0 0.0
    %455 = vmatprep.subr.mxu0 0.0
    %456 = vmatpush1.msra.mxu0 0.0
    %457 = vmatprep.subr.mxu0 0.0
    %458 = vmatpush1.msra.mxu0 0.0
    %459 = vmatprep.subr.mxu0 0.0
    %460 = vmatpush1.msra.mxu0 0.0
    %461 = vmatprep.subr.mxu0 0.0
    %462 = vmatpush1.msra.mxu0 0.0
    %463 = vmatprep.subr.mxu0 0.0
    %464 = vmatpush1.msra.mxu0 0.0
    %465 = vmatprep.subr.mxu0 0.0
    %466 = vmatpush1.msra.mxu0 0.0
    %467 = vmatprep.subr.mxu0 0.0
    %468 = vmatpush1.msra.mxu0 0.0
    %469 = vmatprep.subr.mxu0 0.0
    %470 = vmatpush1.msra.mxu0 0.0
    %471 = vmatprep.subr.mxu0 0.0
    %472 = vmatpush1.msra.mxu0 0.0
    %473 = vmatprep.subr.mxu0 0.0
    %474 = vmatpush1.msra.mxu0 0.0
    %475 = vmatprep.subr.mxu0 0.0
    %476 = vmatpush1.msra.mxu0 0.0
    %477 = vmatprep.subr.mxu0 0.0
    %478 = vmatpush1.msra.mxu0 0.0
    %479 = vmatprep.subr.mxu0 0.0
    %480 = vmatpush1.msra.mxu0 0.0
    %481 = vmatprep.mubr.f32.mxu0 0.0
    %482 = vmatmul.mubr.f32.gmra.mrb[0].mxu0 %v415
    %v483 = vpop.f32.mrb[0].mxu0
    %v484 = vadd.f32 %v411, %v483
    %v485 = vpop.f32.mrb[0].mxu0
    %486 = vdwg.mxu0
    %v487 = vld [vmem:[%s6] sm:$0xff]
    %v488 = vld [vmem:[%s6 + $0x8] sm:$0xff]
    %489 = vmatprep.subr.mxu0 0.0
    %490 = vmatpush1.msra.mxu0 %v487
    %491 = vmatprep.subr.mxu0 0.0
    %492 = vmatpush1.msra.mxu0 %v488
    %493 = vmatprep.subr.mxu0 0.0
    %494 = vmatpush1.msra.mxu0 0.0
    %495 = vmatprep.subr.mxu0 0.0
    %496 = vmatpush1.msra.mxu0 0.0
    %497 = vmatprep.subr.mxu0 0.0
    %498 = vmatpush1.msra.mxu0 0.0
    %499 = vmatprep.subr.mxu0 0.0
    %500 = vmatpush1.msra.mxu0 0.0
    %501 = vmatprep.subr.mxu0 0.0
    %502 = vmatpush1.msra.mxu0 0.0
    %503 = vmatprep.subr.mxu0 0.0
    %504 = vmatpush1.msra.mxu0 0.0
    %505 = vmatprep.subr.mxu0 0.0
    %506 = vmatpush1.msra.mxu0 0.0
    %507 = vmatprep.subr.mxu0 0.0
    %508 = vmatpush1.msra.mxu0 0.0
    %509 = vmatprep.subr.mxu0 0.0
    %510 = vmatpush1.msra.mxu0 0.0
    %511 = vmatprep.subr.mxu0 0.0
    %512 = vmatpush1.msra.mxu0 0.0
    %513 = vmatprep.subr.mxu0 0.0
    %514 = vmatpush1.msra.mxu0 0.0
    %515 = vmatprep.subr.mxu0 0.0
    %516 = vmatpush1.msra.mxu0 0.0
    %517 = vmatprep.subr.mxu0 0.0
    %518 = vmatpush1.msra.mxu0 0.0
    %519 = vmatprep.subr.mxu0 0.0
    %520 = vmatpush1.msra.mxu0 0.0
    %521 = vmatprep.subr.mxu0 0.0
    %522 = vmatpush1.msra.mxu0 0.0
    %523 = vmatprep.subr.mxu0 0.0
    %524 = vmatpush1.msra.mxu0 0.0
    %525 = vmatprep.subr.mxu0 0.0
    %526 = vmatpush1.msra.mxu0 0.0
    %527 = vmatprep.subr.mxu0 0.0
    %528 = vmatpush1.msra.mxu0 0.0
    %529 = vmatprep.subr.mxu0 0.0
    %530 = vmatpush1.msra.mxu0 0.0
    %531 = vmatprep.subr.mxu0 0.0
    %532 = vmatpush1.msra.mxu0 0.0
    %533 = vmatprep.subr.mxu0 0.0
    %534 = vmatpush1.msra.mxu0 0.0
    %535 = vmatprep.subr.mxu0 0.0
    %536 = vmatpush1.msra.mxu0 0.0
    %537 = vmatprep.subr.mxu0 0.0
    %538 = vmatpush1.msra.mxu0 0.0
    %539 = vmatprep.subr.mxu0 0.0
    %540 = vmatpush1.msra.mxu0 0.0
    %541 = vmatprep.subr.mxu0 0.0
    %542 = vmatpush1.msra.mxu0 0.0
    %543 = vmatprep.subr.mxu0 0.0
    %544 = vmatpush1.msra.mxu0 0.0
    %545 = vmatprep.subr.mxu0 0.0
    %546 = vmatpush1.msra.mxu0 0.0
    %547 = vmatprep.subr.mxu0 0.0
    %548 = vmatpush1.msra.mxu0 0.0
    %549 = vmatprep.subr.mxu0 0.0
    %550 = vmatpush1.msra.mxu0 0.0
    %551 = vmatprep.subr.mxu0 0.0
    %552 = vmatpush1.msra.mxu0 0.0
    %553 = vmatprep.mubr.f32.mxu0 0.0
    %554 = vmatmul.mubr.f32.gmra.mrb[0].mxu0 %v38
    %v555 = vpop.f32.mrb[0].mxu0
    %v556 = vadd.f32 0.0, %v555
    %v557 = vpop.f32.mrb[0].mxu0
    %558 = vdwg.mxu0
    %v559 = vsub.f32 %v556, 1.0
    %v560 = vmul.f32 %v559, 1e+10
    %v561 = vadd.f32 %v484, %v560
    %vm562 = vcmask 58368
    %563 = vst.msk [vmem:[#allocation2] sm:$0x3] %vm562, %v561
    // Predicated region
    $region30: #{tpu_custom_call.1} parent=1 // pred_check
      _
    $region31: #{tpu_custom_call.1} parent=1 // pred_check_branch
      %565 = sbr.rel (0) target = $region33
    $region32: #{tpu_custom_call.1} parent=1 // pred_region
      %s567 = ssub.s32 32, 32
      %568 = vsyncadd [#allocation3], %s567
      %s570 = sshll.u32 [#allocation2], 4
      %s571 = int_to_ptr.vmem [resolvable:$true] %s570
      %573 = dma.vmem_to_hbm [thread:$0]  %s571, 32, %s7, [#allocation3]
    $region33: #{tpu_custom_call.1} parent=1 // pred_fallthru
      _
    // Predicated region
    $region34: #{tpu_custom_call.1} parent=1 // pred_check
      _
    $region35: #{tpu_custom_call.1} parent=1 // pred_check_branch
      %575 = sbr.rel (0) target = $region37
    $region36: #{tpu_custom_call.1} parent=1 // pred_region
      %576 = dma.done [#allocation3], 32
    $region37: #{tpu_custom_call.1} parent=1 // pred_fallthru
      _
    %577 = vsyncpa [#allocation3], 1

</llo_original>
